<compile_context>
chip_gen: v7x
topology: tpu7x:2x2x1
jax: 0.10.0
libtpu: 0.0.40
codegen_flags: <defaults>
</compile_context>

<pallas_src>
import functools
import math

import jax
import jax.numpy as jnp
from jax.experimental import pallas as pl
from jax.experimental.pallas import tpu as pltpu

LANE = 128


def _round_up_to_lane(n):
    return ((n + LANE - 1) // LANE) * LANE


def fuse_gima_params(params, hidden_dim):
    """Precompute the fused, scale-folded, lane-padded QKV weight & bias.

    Call ONCE at init (hoists the per-call concat/pad out of the hot path).
    Returns wqkv: (2H, 3*Hp), bqkv: (1, 3*Hp) with Hp = round_up(H, 128).
    """
    H = hidden_dim
    Hp = _round_up_to_lane(H)
    inv_scale = 1.0 / math.sqrt(float(H))

    def pad_cols(m):
        return jnp.pad(m, ((0, 0), (0, Hp - m.shape[1])))

    wqkv = jnp.concatenate(
        [pad_cols(params["wq"] * inv_scale),   # scale folded into Q weights
         pad_cols(params["wk"]),
         pad_cols(params["wv"])], axis=1)
    bqkv = jnp.concatenate(
        [pad_cols(params["bq"] * inv_scale),   # ... and Q bias
         pad_cols(params["bk"]),
         pad_cols(params["bv"])], axis=1)
    return wqkv, bqkv


def _gima_kernel(audio_ref, text_ref, wqkv_ref, bqkv_ref,
                 att_out_ref, attn_ref, *,
                 hidden_pad, s_audio, s_text, seq_pad):
    Hp = hidden_pad
    S = s_audio + s_text
    Bb = audio_ref.shape[0]
    H2 = audio_ref.shape[2]

    w = wqkv_ref[...]                                   # (2H, 3*Hp)
    b = bqkv_ref[...]                                   # (1, 3*Hp)

    # Project each modality straight off its input block (no staging scratch):
    # the audio matmul can issue while the text block's DMA is still landing.
    # Leading-dim collapse keeps the lane dim untouched (free reshape).
    a2 = audio_ref[...].reshape(Bb * s_audio, H2)
    t2 = text_ref[...].reshape(Bb * s_text, H2)
    qkv_a = (jnp.dot(a2, w, preferred_element_type=jnp.float32) + b
             ).reshape(Bb, s_audio, 3 * Hp)
    qkv_t = (jnp.dot(t2, w, preferred_element_type=jnp.float32) + b
             ).reshape(Bb, s_text, 3 * Hp)
    # Sublane-axis concat; s_audio is 8-aligned at the shapes used here so
    # the boundary stays on a sublane tile (see note in wrapper).
    qkv = jnp.concatenate([qkv_a, qkv_t], axis=1)       # (Bb, S, 3*Hp)

    # 128-lane-aligned full-segment slices (free; no relayout copies).
    # 1/sqrt(H) and the zero padding were folded in by fuse_gima_params.
    q = qkv[:, :, 0:Hp]
    k = qkv[:, :, Hp:2 * Hp]
    v = qkv[:, :, 2 * Hp:3 * Hp]

    # energy = Q K^T: contract the (padded) hidden dim -> no K transpose.
    energy = jnp.einsum("bqh,bkh->bqk", q, k,
                        preferred_element_type=jnp.float32)   # (Bb, S, S)

    # Numerically-stable softmax; exact reciprocal (1e-5 attention tolerance).
    m = jnp.max(energy, axis=-1, keepdims=True)
    e = jnp.exp(energy - m)
    denom = jnp.sum(e, axis=-1, keepdims=True)
    attn = e * pl.reciprocal(denom, approx=False)             # (Bb, S, S)

    # attn @ V; padded V columns are zero, so attended's pad columns are zero
    # and the store is a full-width, unmasked, lane-dense vst.
    attended = jnp.einsum("bqk,bkh->bqh", attn, v,
                          preferred_element_type=jnp.float32)  # (Bb, S, Hp)
    att_out_ref[...] = attended.astype(att_out_ref.dtype)

    if seq_pad == S:
        attn_ref[...] = attn.astype(attn_ref.dtype)
    else:
        pad = jnp.zeros((Bb, S, seq_pad - S), attn.dtype)
        attn_ref[...] = jnp.concatenate([attn, pad], axis=-1).astype(attn_ref.dtype)


def global_inter_modal_attention(audio_features, text_features, fused_params,
                                 hidden_dim):
    """audio_features: (B, S_a, 2H); text_features: (B, S_t, 2H); float32.

    fused_params = fuse_gima_params(params, hidden_dim), computed once at init.
    """
    wqkv, bqkv = fused_params
    B, S_a, H2 = audio_features.shape
    Bt, S_t, H2_t = text_features.shape
    H = hidden_dim
    assert H2 == 2 * H and H2_t == H2 and Bt == B
    S = S_a + S_t
    Hp = wqkv.shape[1] // 3
    Sp = _round_up_to_lane(S)

    # Batch-block the grid so each step carries enough rows to amortize the
    # per-step pipeline overhead; keep the grid "parallel" for megacore.
    # NOTE: if S_a is not a multiple of 8 in production, pad it (or reorder
    # modalities) so the concat boundary stays sublane-aligned.
    Bb = 8 if B % 8 == 0 else B
    grid = (B // Bb,)

    kernel = functools.partial(
        _gima_kernel, hidden_pad=Hp, s_audio=S_a, s_text=S_t, seq_pad=Sp)

    # TODO(synk): at production S/H, tile the query axis (grid=(B//Bb, S//TQ),
    # attention out block (Bb, TQ, S)) so the double-buffered (S,S) block fits
    # v7x's 64 MiB VMEM, add a second "parallel" grid axis for the 2 TCs,
    # single-buffer the constant-index weight specs (pipeline_mode=
    # pl.Buffered(1)), and set pltpu.CompilerParams(vmem_limit_bytes=...).
    attended_p, attention_p = pl.pallas_call(
        kernel,
        out_shape=(
            jax.ShapeDtypeStruct((B, S, Hp), jnp.float32),
            jax.ShapeDtypeStruct((B, S, Sp), jnp.float32),
        ),
        grid=grid,
        in_specs=[
            pl.BlockSpec((Bb, S_a, H2), lambda i: (i, 0, 0)),   # audio
            pl.BlockSpec((Bb, S_t, H2), lambda i: (i, 0, 0)),   # text
            pl.BlockSpec((H2, 3 * Hp), lambda i: (0, 0)),       # fused Wqkv
            pl.BlockSpec((1, 3 * Hp), lambda i: (0, 0)),        # fused bqkv
        ],
        out_specs=(
            pl.BlockSpec((Bb, S, Hp), lambda i: (i, 0, 0)),
            pl.BlockSpec((Bb, S, Sp), lambda i: (i, 0, 0)),
        ),
        compiler_params=pltpu.CompilerParams(dimension_semantics=("parallel",)),
    )(audio_features, text_features, wqkv, bqkv)

    attended = attended_p if Hp == H else attended_p[:, :, :H]
    attention = attention_p if Sp == S else attention_p[:, :, :S]
    return attended, attention


def _reference(audio, text, params, hidden_dim):
    """Pure-JAX reference mirroring the PyTorch forward."""
    x = jnp.concatenate([audio, text], axis=1)
    q = x @ params["wq"] + params["bq"][0]
    k = x @ params["wk"] + params["bk"][0]
    v = x @ params["wv"] + params["bv"][0]
    energy = jnp.einsum("bqh,bkh->bqk", q, k) / math.sqrt(float(hidden_dim))
    attn = jax.nn.softmax(energy, axis=-1)
    out = jnp.einsum("bqk,bkh->bqh", attn, v)
    return out, attn


if __name__ == "__main__":
    # small shapes consistent with the module
    B, S_A, S_T, H = 2, 8, 8, 32
    H2 = 2 * H

    key = jax.random.PRNGKey(0)
    k_a, k_t, k_wq, k_bq, k_wk, k_bk, k_wv, k_bv = jax.random.split(key, 8)

    audio = jax.random.normal(k_a, (B, S_A, H2), dtype=jnp.float32)
    text = jax.random.normal(k_t, (B, S_T, H2), dtype=jnp.float32)

    # nn.Linear(hidden_dim*2, hidden_dim) parameters; weights stored
    # pre-transposed as (in_features, out_features) = (2H, H), biases (1, H).
    bound = 1.0 / math.sqrt(H2)
    params = {
        "wq": jax.random.uniform(k_wq, (H2, H), jnp.float32, -bound, bound),
        "bq": jax.random.uniform(k_bq, (1, H), jnp.float32, -bound, bound),
        "wk": jax.random.uniform(k_wk, (H2, H), jnp.float32, -bound, bound),
        "bk": jax.random.uniform(k_bk, (1, H), jnp.float32, -bound, bound),
        "wv": jax.random.uniform(k_wv, (H2, H), jnp.float32, -bound, bound),
        "bv": jax.random.uniform(k_bv, (1, H), jnp.float32, -bound, bound),
    }

    # Fuse / pad / scale-fold the projection weights ONCE (init-time cost).
    fused = fuse_gima_params(params, H)

    attended, attention = global_inter_modal_attention(audio, text, fused, H)
    jax.block_until_ready((attended, attention))

    ref_out, ref_attn = _reference(audio, text, params, H)
    assert attended.shape == (B, S_A + S_T, H)
    assert attention.shape == (B, S_A + S_T, S_A + S_T)
    assert jnp.allclose(attended, ref_out, atol=1e-4, rtol=1e-4)
    assert jnp.allclose(attention, ref_attn, atol=1e-5, rtol=1e-4)

    print("KERNEL_OK")
</pallas_src>

<mosaic_0001>
module attributes {stable_mosaic.version = 11 : i64} {
  func.func @_gima_kernel(%arg0: i32, %arg1: memref<2x8x64xf32, #tpu.memory_space<vmem>>, %arg2: memref<2x8x64xf32, #tpu.memory_space<vmem>>, %arg3: memref<64x384xf32, #tpu.memory_space<vmem>>, %arg4: memref<1x384xf32, #tpu.memory_space<vmem>>, %arg5: memref<2x16x128xf32, #tpu.memory_space<vmem>>, %arg6: memref<2x16x128xf32, #tpu.memory_space<vmem>>) attributes {dimension_semantics = [#tpu.dimension_semantics<parallel>], iteration_bounds = array<i64: 1>, scalar_prefetch = 0 : i64, scratch_operands = 0 : i64, tpu.core_type = #tpu.core_type<tc>, window_params = [{transform_indices = @transform_0, window_bounds = array<i64: 2, 8, 64>}, {transform_indices = @transform_1, window_bounds = array<i64: 2, 8, 64>}, {pipeline_mode = #tpu.pipeline_mode<synchronous>, transform_indices = @transform_2, window_bounds = array<i64: 64, 384>}, {pipeline_mode = #tpu.pipeline_mode<synchronous>, transform_indices = @transform_3, window_bounds = array<i64: 1, 384>}, {transform_indices = @transform_4, window_bounds = array<i64: 2, 16, 128>}, {transform_indices = @transform_5, window_bounds = array<i64: 2, 16, 128>}]} {
    %c0 = arith.constant 0 : index
    %c0_0 = arith.constant 0 : index
    %0 = vector.load %arg3[%c0, %c0_0] : memref<64x384xf32, #tpu.memory_space<vmem>>, vector<64x384xf32>
    %c0_1 = arith.constant 0 : index
    %c0_2 = arith.constant 0 : index
    %1 = vector.load %arg4[%c0_1, %c0_2] : memref<1x384xf32, #tpu.memory_space<vmem>>, vector<1x384xf32>
    %c0_3 = arith.constant 0 : index
    %c0_4 = arith.constant 0 : index
    %c0_5 = arith.constant 0 : index
    %2 = vector.load %arg1[%c0_3, %c0_4, %c0_5] : memref<2x8x64xf32, #tpu.memory_space<vmem>>, vector<2x8x64xf32>
    %3 = vector.shape_cast %2 : vector<2x8x64xf32> to vector<16x64xf32>
    %c0_6 = arith.constant 0 : index
    %c0_7 = arith.constant 0 : index
    %c0_8 = arith.constant 0 : index
    %4 = vector.load %arg2[%c0_6, %c0_7, %c0_8] : memref<2x8x64xf32, #tpu.memory_space<vmem>>, vector<2x8x64xf32>
    %5 = vector.shape_cast %4 : vector<2x8x64xf32> to vector<16x64xf32>
    %cst = arith.constant dense<0.000000e+00> : vector<16x384xf32>
    %6 = tpu.matmul %3, %0, %cst {dimension_numbers = #tpu.dot_dimension_numbers<[1], [0], [0], [1], [0, 0, 1, 1], [], []>} : vector<16x64xf32>, vector<64x384xf32>, vector<16x384xf32> -> vector<16x384xf32>
    %7 = vector.broadcast %1 : vector<1x384xf32> to vector<16x384xf32>
    %8 = arith.addf %6, %7 : vector<16x384xf32>
    %9 = vector.shape_cast %8 : vector<16x384xf32> to vector<2x8x384xf32>
    %cst_9 = arith.constant dense<0.000000e+00> : vector<16x384xf32>
    %10 = tpu.matmul %5, %0, %cst_9 {dimension_numbers = #tpu.dot_dimension_numbers<[1], [0], [0], [1], [0, 0, 1, 1], [], []>} : vector<16x64xf32>, vector<64x384xf32>, vector<16x384xf32> -> vector<16x384xf32>
    %11 = vector.broadcast %1 : vector<1x384xf32> to vector<16x384xf32>
    %12 = arith.addf %10, %11 : vector<16x384xf32>
    %13 = vector.shape_cast %12 : vector<16x384xf32> to vector<2x8x384xf32>
    %14 = tpu.concatenate %9, %13 in 1 : vector<2x8x384xf32>, vector<2x8x384xf32> -> vector<2x16x384xf32>
    %15 = vector.extract_strided_slice %14 {offsets = [0, 0, 0], sizes = [2, 16, 128], strides = [1, 1, 1]} : vector<2x16x384xf32> to vector<2x16x128xf32>
    %16 = vector.extract_strided_slice %14 {offsets = [0, 0, 128], sizes = [2, 16, 128], strides = [1, 1, 1]} : vector<2x16x384xf32> to vector<2x16x128xf32>
    %17 = vector.extract_strided_slice %14 {offsets = [0, 0, 256], sizes = [2, 16, 128], strides = [1, 1, 1]} : vector<2x16x384xf32> to vector<2x16x128xf32>
    "tpu.trace_start"() <{level = 10 : i32, message = "bqh,bkh->bqk"}> : () -> ()
    %cst_10 = arith.constant dense<0.000000e+00> : vector<2x16x16xf32>
    %18 = tpu.matmul %15, %16, %cst_10 {dimension_numbers = #tpu.dot_dimension_numbers<[2], [2], [1], [1], [0, 0, 0, 1, 1, 1], [0], [0]>} : vector<2x16x128xf32>, vector<2x16x128xf32>, vector<2x16x16xf32> -> vector<2x16x16xf32>
    "tpu.trace_stop"() : () -> ()
    %cst_11 = arith.constant dense<0xFF800000> : vector<2x16xf32>
    %19 = vector.multi_reduction <maximumf>, %18, %cst_11 [2] : vector<2x16x16xf32> to vector<2x16xf32>
    %20 = vector.shape_cast %19 : vector<2x16xf32> to vector<2x16x1xf32>
    %21 = vector.broadcast %20 : vector<2x16x1xf32> to vector<2x16x16xf32>
    %22 = arith.subf %18, %21 : vector<2x16x16xf32>
    %23 = math.exp %22 : vector<2x16x16xf32>
    %cst_12 = arith.constant dense<0.000000e+00> : vector<2x16xf32>
    %24 = vector.multi_reduction <add>, %23, %cst_12 [2] : vector<2x16x16xf32> to vector<2x16xf32>
    %25 = vector.shape_cast %24 : vector<2x16xf32> to vector<2x16x1xf32>
    %26 = tpu.reciprocal %25 : vector<2x16x1xf32> -> vector<2x16x1xf32>
    %27 = vector.broadcast %26 : vector<2x16x1xf32> to vector<2x16x16xf32>
    %28 = arith.mulf %23, %27 : vector<2x16x16xf32>
    "tpu.trace_start"() <{level = 10 : i32, message = "bqk,bkh->bqh"}> : () -> ()
    %cst_13 = arith.constant dense<0.000000e+00> : vector<2x16x128xf32>
    %29 = tpu.matmul %28, %17, %cst_13 {dimension_numbers = #tpu.dot_dimension_numbers<[2], [1], [1], [2], [0, 0, 0, 1, 1, 2], [0], [0]>} : vector<2x16x16xf32>, vector<2x16x128xf32>, vector<2x16x128xf32> -> vector<2x16x128xf32>
    "tpu.trace_stop"() : () -> ()
    %c0_14 = arith.constant 0 : index
    %c0_15 = arith.constant 0 : index
    %c0_16 = arith.constant 0 : index
    %30 = vector.load %arg5[%c0_14, %c0_15, %c0_16] : memref<2x16x128xf32, #tpu.memory_space<vmem>>, vector<2x16x128xf32>
    tpu.vector_store %arg5[%c0_14, %c0_15, %c0_16], %29 {strides = array<i32>} : memref<2x16x128xf32, #tpu.memory_space<vmem>>, vector<2x16x128xf32>,
    %cst_17 = arith.constant 0.000000e+00 : f32
    %31 = vector.broadcast %cst_17 : f32 to vector<2x16x112xf32>
    %32 = tpu.concatenate %28, %31 in 2 : vector<2x16x16xf32>, vector<2x16x112xf32> -> vector<2x16x128xf32>
    %c0_18 = arith.constant 0 : index
    %c0_19 = arith.constant 0 : index
    %c0_20 = arith.constant 0 : index
    %33 = vector.load %arg6[%c0_18, %c0_19, %c0_20] : memref<2x16x128xf32, #tpu.memory_space<vmem>>, vector<2x16x128xf32>
    tpu.vector_store %arg6[%c0_18, %c0_19, %c0_20], %32 {strides = array<i32>} : memref<2x16x128xf32, #tpu.memory_space<vmem>>, vector<2x16x128xf32>,
    return
  }
  func.func @transform_0(%arg0: i32) -> (i32, i32, i32) {
    %c0_i32 = arith.constant 0 : i32
    %c0_i32_0 = arith.constant 0 : i32
    %c0_i32_1 = arith.constant 0 : i32
    return %arg0, %c0_i32, %c0_i32_0 : i32, i32, i32
  }
  func.func @transform_1(%arg0: i32) -> (i32, i32, i32) {
    %c0_i32 = arith.constant 0 : i32
    %c0_i32_0 = arith.constant 0 : i32
    %c0_i32_1 = arith.constant 0 : i32
    return %arg0, %c0_i32, %c0_i32_0 : i32, i32, i32
  }
  func.func @transform_2(%arg0: i32) -> (i32, i32) {
    %c0_i32 = arith.constant 0 : i32
    %c0_i32_0 = arith.constant 0 : i32
    %c0_i32_1 = arith.constant 0 : i32
    return %c0_i32, %c0_i32_0 : i32, i32
  }
  func.func @transform_3(%arg0: i32) -> (i32, i32) {
    %c0_i32 = arith.constant 0 : i32
    %c0_i32_0 = arith.constant 0 : i32
    %c0_i32_1 = arith.constant 0 : i32
    return %c0_i32, %c0_i32_0 : i32, i32
  }
  func.func @transform_4(%arg0: i32) -> (i32, i32, i32) {
    %c0_i32 = arith.constant 0 : i32
    %c0_i32_0 = arith.constant 0 : i32
    %c0_i32_1 = arith.constant 0 : i32
    return %arg0, %c0_i32, %c0_i32_0 : i32, i32, i32
  }
  func.func @transform_5(%arg0: i32) -> (i32, i32, i32) {
    %c0_i32 = arith.constant 0 : i32
    %c0_i32_0 = arith.constant 0 : i32
    %c0_i32_1 = arith.constant 0 : i32
    return %arg0, %c0_i32, %c0_i32_0 : i32, i32, i32
  }
}

</mosaic_0001>

<llo_original>
// kernel: tpu_custom_call.1
$region0: #{tpu_custom_call.1}
  #allocation0 [shape = 'u32[]', space=smem, size = 0x4, offset = 0x4, fixed_abs, tag = 'smem constant byte address 0x4 - core index']
  #allocation1 [shape = 'u32[144,128]{1,0:T(1,128)}', space=vmem, size = 0x12000, scoped, tag = 'internal scratch']
  %s0 = inlined_call_operand.hbm [shape: f32[2,8,64], index: 0, kind: input, shape index: {}]
  %s1 = inlined_call_operand.hbm [shape: f32[2,8,64], index: 1, kind: input, shape index: {}]
  %s2 = inlined_call_operand.hbm [shape: f32[64,384], index: 2, kind: input, shape index: {}]
  %s3 = inlined_call_operand.vmem [shape: f32[1,384], index: 3, kind: input, shape index: {}]
  %s4 = inlined_call_operand.hbm [shape: f32[2,16,128], index: 4, kind: output, shape index: {0}]
  %s5 = inlined_call_operand.hbm [shape: f32[2,16,128], index: 5, kind: output, shape index: {1}]
  %6 = xla_tuple %s4, %s5
  %s7 = sld [smem:[#allocation0]]
  $region46: #{tpu_custom_call.1} parent=0
    _
  %s9 = ssub.s32 1, %s7
  %s10 = scalar_select 0, %s9, %s7
  $region1: #{tpu_custom_call.1} parent=0
    #allocation2 [shape = 'u8[8192]{0}', space=vmem, size = 0x2000, scoped, tag = 'input window, operand 0, single buffered']
    #allocation3 [shape = 's32[1]{0}', space=sflag, size = 0x4, scoped, tag = 'scoped memory for tpu_custom_call.1']
    #allocation4 [shape = 's32[1]{0}', space=sflag, size = 0x4, scoped, tag = 'scoped memory for tpu_custom_call.1']
    #allocation5 [shape = 'u8[8192]{0}', space=vmem, size = 0x2000, scoped, tag = 'input window, operand 1, single buffered']
    #allocation6 [shape = 's32[1]{0}', space=sflag, size = 0x4, scoped, tag = 'scoped memory for tpu_custom_call.1']
    #allocation7 [shape = 'u8[98304]{0}', space=vmem, size = 0x18000, scoped, tag = 'input window, operand 2, single buffered']
    #allocation8 [shape = 'u8[16384]{0}', space=vmem, size = 0x4000, scoped, tag = 'output window, operand 0, single buffered']
    #allocation9 [shape = 'u8[16384]{0}', space=vmem, size = 0x4000, scoped, tag = 'output window, operand 1, single buffered']
    #allocation10 [shape = 's32[1]{0}', space=sflag, size = 0x4, scoped, tag = 'scoped memory for tpu_custom_call.1']
    %11 = vsyncpa [#allocation3], 0
    %12 = vsyncpa [#allocation6], 0
    %13 = vsyncpa [#allocation4], 0
    %14 = vsyncpa [#allocation10], 0
    // Predicated region
    $region2: #{tpu_custom_call.1} parent=1 // pred_check
      _
    $region3: #{tpu_custom_call.1} parent=1 // pred_check_branch
      %16 = sbr.rel (0) target = $region5
    $region4: #{tpu_custom_call.1} parent=1 // pred_region
      %s18 = ssub.s32 256, 256
      %19 = vsyncadd [#allocation3], %s18
      %s20 = sshll.u32 [#allocation2], 4
      %s21 = int_to_ptr.vmem [resolvable:$true] %s20
      %26 = dma.hbm_to_vmem [thread:$0]  %s0, 256, %s21, [#allocation3], 128, 128, 8
    $region5: #{tpu_custom_call.1} parent=1 // pred_fallthru
      _
    // Predicated region
    $region6: #{tpu_custom_call.1} parent=1 // pred_check
      _
    $region7: #{tpu_custom_call.1} parent=1 // pred_check_branch
      %28 = sbr.rel (0) target = $region9
    $region8: #{tpu_custom_call.1} parent=1 // pred_region
      %s30 = ssub.s32 256, 256
      %31 = vsyncadd [#allocation6], %s30
      %s32 = sshll.u32 [#allocation5], 4
      %s33 = int_to_ptr.vmem [resolvable:$true] %s32
      %38 = dma.hbm_to_vmem [thread:$0]  %s1, 256, %s33, [#allocation6], 128, 128, 8
    $region9: #{tpu_custom_call.1} parent=1 // pred_fallthru
      _
    // Predicated region
    $region10: #{tpu_custom_call.1} parent=1 // pred_check
      _
    $region11: #{tpu_custom_call.1} parent=1 // pred_check_branch
      %40 = sbr.rel (0) target = $region13
    $region12: #{tpu_custom_call.1} parent=1 // pred_region
      %s42 = ssub.s32 3072, 3072
      %43 = vsyncadd [#allocation6], %s42
      %s44 = sshll.u32 [#allocation7], 4
      %s45 = int_to_ptr.vmem [resolvable:$true] %s44
      %50 = dma.hbm_to_vmem [thread:$0]  %s2, 3072, %s45, [#allocation6], 384, 384, 24
    $region13: #{tpu_custom_call.1} parent=1 // pred_fallthru
      _
    // Predicated region
    $region14: #{tpu_custom_call.1} parent=1 // pred_check
      _
    $region15: #{tpu_custom_call.1} parent=1 // pred_check_branch
      %52 = sbr.rel (0) target = $region17
    $region16: #{tpu_custom_call.1} parent=1 // pred_region
      _
    $region17: #{tpu_custom_call.1} parent=1 // pred_fallthru
      _
    // Predicated region
    $region18: #{tpu_custom_call.1} parent=1 // pred_check
      _
    $region19: #{tpu_custom_call.1} parent=1 // pred_check_branch
      %54 = sbr.rel (0) target = $region21
    $region20: #{tpu_custom_call.1} parent=1 // pred_region
      %55 = dma.done [#allocation3], 256
    $region21: #{tpu_custom_call.1} parent=1 // pred_fallthru
      _
    // Predicated region
    $region22: #{tpu_custom_call.1} parent=1 // pred_check
      _
    $region23: #{tpu_custom_call.1} parent=1 // pred_check_branch
      %57 = sbr.rel (0) target = $region25
    $region24: #{tpu_custom_call.1} parent=1 // pred_region
      %58 = dma.done [#allocation6], 256
    $region25: #{tpu_custom_call.1} parent=1 // pred_fallthru
      _
    // Predicated region
    $region26: #{tpu_custom_call.1} parent=1 // pred_check
      _
    $region27: #{tpu_custom_call.1} parent=1 // pred_check_branch
      %60 = sbr.rel (0) target = $region29
    $region28: #{tpu_custom_call.1} parent=1 // pred_region
      %61 = dma.done [#allocation6], 3072
    $region29: #{tpu_custom_call.1} parent=1 // pred_fallthru
      _
    %v62 = vld [vmem:[#allocation7] sm:$0xff]
    %v63 = vld [vmem:[#allocation7 + $0x8] sm:$0xff]
    %v64 = vld [vmem:[#allocation7 + $0x10] sm:$0xff]
    %v65 = vld [vmem:[#allocation7 + $0x18] sm:$0xff]
    %v66 = vld [vmem:[#allocation7 + $0x20] sm:$0xff]
    %v67 = vld [vmem:[#allocation7 + $0x28] sm:$0xff]
    %v68 = vld [vmem:[#allocation7 + $0x30] sm:$0xff]
    %v69 = vld [vmem:[#allocation7 + $0x38] sm:$0xff]
    %v70 = vld [vmem:[#allocation7 + $0x40] sm:$0xff]
    %v71 = vld [vmem:[#allocation7 + $0x48] sm:$0xff]
    %v72 = vld [vmem:[#allocation7 + $0x50] sm:$0xff]
    %v73 = vld [vmem:[#allocation7 + $0x58] sm:$0xff]
    %v74 = vld [vmem:[#allocation7 + $0x60] sm:$0xff]
    %v75 = vld [vmem:[#allocation7 + $0x68] sm:$0xff]
    %v76 = vld [vmem:[#allocation7 + $0x70] sm:$0xff]
    %v77 = vld [vmem:[#allocation7 + $0x78] sm:$0xff]
    %v78 = vld [vmem:[#allocation7 + $0x80] sm:$0xff]
    %v79 = vld [vmem:[#allocation7 + $0x88] sm:$0xff]
    %v80 = vld [vmem:[#allocation7 + $0x90] sm:$0xff]
    %v81 = vld [vmem:[#allocation7 + $0x98] sm:$0xff]
    %v82 = vld [vmem:[#allocation7 + $0xa0] sm:$0xff]
    %v83 = vld [vmem:[#allocation7 + $0xa8] sm:$0xff]
    %v84 = vld [vmem:[#allocation7 + $0xb0] sm:$0xff]
    %v85 = vld [vmem:[#allocation7 + $0xb8] sm:$0xff]
    %v86 = vld [vmem:[%s3] sm:$0x7]
    %v87 = vld [vmem:[#allocation2] sm:$0xff]
    %v88 = vld [vmem:[#allocation2 + $0x8] sm:$0xff]
    %v89 = vld [vmem:[#allocation5] sm:$0xff]
    %v90 = vld [vmem:[#allocation5 + $0x8] sm:$0xff]
    %v92 = vlaneseq
    %v93 = vshrl.u32 %v92, 7
    %v94 = vsub.s32 0, %v93
    %v95 = vrot.slane %v86, %v94
    %v96 = vlaneseq
    %v97 = vshrl.u32 %v96, 7
    %v98 = vsub.s32 1, %v97
    %v99 = vrot.slane %v86, %v98
    %v100 = vlaneseq
    %v101 = vshrl.u32 %v100, 7
    %v102 = vsub.s32 2, %v101
    %v103 = vrot.slane %v86, %v102
    %vm107 = vcmask 523264
    %v109 = vsel %vm107, %v87, 0
    %v112 = vsel %vm107, %v88, 0
    %114 = vmatprep.subr.mxu0 %v63
    %115 = vmatpush1.msra.mxu0 %v62
    %116 = vmatprep.subr.mxu0 %v66
    %117 = vmatpush1.msra.mxu0 %v65
    %118 = vmatprep.subr.mxu0 %v69
    %119 = vmatpush1.msra.mxu0 %v68
    %120 = vmatprep.subr.mxu0 %v72
    %121 = vmatpush1.msra.mxu0 %v71
    %122 = vmatprep.subr.mxu0 %v75
    %123 = vmatpush1.msra.mxu0 %v74
    %124 = vmatprep.subr.mxu0 %v78
    %125 = vmatpush1.msra.mxu0 %v77
    %126 = vmatprep.subr.mxu0 %v81
    %127 = vmatpush1.msra.mxu0 %v80
    %128 = vmatprep.subr.mxu0 %v84
    %129 = vmatpush1.msra.mxu0 %v83
    %130 = vmatprep.subr.mxu0 0.0
    %131 = vmatpush1.msra.mxu0 0.0
    %132 = vmatprep.subr.mxu0 0.0
    %133 = vmatpush1.msra.mxu0 0.0
    %134 = vmatprep.subr.mxu0 0.0
    %135 = vmatpush1.msra.mxu0 0.0
    %136 = vmatprep.subr.mxu0 0.0
    %137 = vmatpush1.msra.mxu0 0.0
    %138 = vmatprep.subr.mxu0 0.0
    %139 = vmatpush1.msra.mxu0 0.0
    %140 = vmatprep.subr.mxu0 0.0
    %141 = vmatpush1.msra.mxu0 0.0
    %142 = vmatprep.subr.mxu0 0.0
    %143 = vmatpush1.msra.mxu0 0.0
    %144 = vmatprep.subr.mxu0 0.0
    %145 = vmatpush1.msra.mxu0 0.0
    %146 = vmatprep.subr.mxu0 0.0
    %147 = vmatpush1.msra.mxu0 0.0
    %148 = vmatprep.subr.mxu0 0.0
    %149 = vmatpush1.msra.mxu0 0.0
    %150 = vmatprep.subr.mxu0 0.0
    %151 = vmatpush1.msra.mxu0 0.0
    %152 = vmatprep.subr.mxu0 0.0
    %153 = vmatpush1.msra.mxu0 0.0
    %154 = vmatprep.subr.mxu0 0.0
    %155 = vmatpush1.msra.mxu0 0.0
    %156 = vmatprep.subr.mxu0 0.0
    %157 = vmatpush1.msra.mxu0 0.0
    %158 = vmatprep.subr.mxu0 0.0
    %159 = vmatpush1.msra.mxu0 0.0
    %160 = vmatprep.subr.mxu0 0.0
    %161 = vmatpush1.msra.mxu0 0.0
    %162 = vmatprep.subr.mxu0 0.0
    %163 = vmatpush1.msra.mxu0 0.0
    %164 = vmatprep.subr.mxu0 0.0
    %165 = vmatpush1.msra.mxu0 0.0
    %166 = vmatprep.subr.mxu0 0.0
    %167 = vmatpush1.msra.mxu0 0.0
    %168 = vmatprep.subr.mxu0 0.0
    %169 = vmatpush1.msra.mxu0 0.0
    %170 = vmatprep.subr.mxu0 0.0
    %171 = vmatpush1.msra.mxu0 0.0
    %172 = vmatprep.subr.mxu0 0.0
    %173 = vmatpush1.msra.mxu0 0.0
    %174 = vmatprep.subr.mxu0 0.0
    %175 = vmatpush1.msra.mxu0 0.0
    %176 = vmatprep.subr.mxu0 0.0
    %177 = vmatpush1.msra.mxu0 0.0
    %178 = vmatprep.mubr.f32.mxu0 0.0
    %179 = vmatmul.mubr.f32.gmra.mrb[0].mxu0 %v109
    %v180 = vpop.f32.mrb[0].mxu0
    %v181 = vadd.f32 %v95, %v180
    %v182 = vpop.f32.mrb[0].mxu0
    %v183 = vadd.f32 %v99, %v182
    %184 = vmatprep.mubr.f32.mxu0 0.0
    %185 = vmatmul.mubr.f32.gmra.mrb[0].mxu0 %v112
    %v186 = vpop.f32.mrb[0].mxu0
    %v187 = vadd.f32 %v95, %v186
    %v188 = vpop.f32.mrb[0].mxu0
    %v189 = vadd.f32 %v99, %v188
    %190 = vdwg.mxu0
    %191 = vmatprep.subr.mxu0 0.0
    %192 = vmatpush1.msra.mxu0 %v64
    %193 = vmatprep.subr.mxu0 0.0
    %194 = vmatpush1.msra.mxu0 %v67
    %195 = vmatprep.subr.mxu0 0.0
    %196 = vmatpush1.msra.mxu0 %v70
    %197 = vmatprep.subr.mxu0 0.0
    %198 = vmatpush1.msra.mxu0 %v73
    %199 = vmatprep.subr.mxu0 0.0
    %200 = vmatpush1.msra.mxu0 %v76
    %201 = vmatprep.subr.mxu0 0.0
    %202 = vmatpush1.msra.mxu0 %v79
    %203 = vmatprep.subr.mxu0 0.0
    %204 = vmatpush1.msra.mxu0 %v82
    %205 = vmatprep.subr.mxu0 0.0
    %206 = vmatpush1.msra.mxu0 %v85
    %207 = vmatprep.subr.mxu0 0.0
    %208 = vmatpush1.msra.mxu0 0.0
    %209 = vmatprep.subr.mxu0 0.0
    %210 = vmatpush1.msra.mxu0 0.0
    %211 = vmatprep.subr.mxu0 0.0
    %212 = vmatpush1.msra.mxu0 0.0
    %213 = vmatprep.subr.mxu0 0.0
    %214 = vmatpush1.msra.mxu0 0.0
    %215 = vmatprep.subr.mxu0 0.0
    %216 = vmatpush1.msra.mxu0 0.0
    %217 = vmatprep.subr.mxu0 0.0
    %218 = vmatpush1.msra.mxu0 0.0
    %219 = vmatprep.subr.mxu0 0.0
    %220 = vmatpush1.msra.mxu0 0.0
    %221 = vmatprep.subr.mxu0 0.0
    %222 = vmatpush1.msra.mxu0 0.0
    %223 = vmatprep.subr.mxu0 0.0
    %224 = vmatpush1.msra.mxu0 0.0
    %225 = vmatprep.subr.mxu0 0.0
    %226 = vmatpush1.msra.mxu0 0.0
    %227 = vmatprep.subr.mxu0 0.0
    %228 = vmatpush1.msra.mxu0 0.0
    %229 = vmatprep.subr.mxu0 0.0
    %230 = vmatpush1.msra.mxu0 0.0
    %231 = vmatprep.subr.mxu0 0.0
    %232 = vmatpush1.msra.mxu0 0.0
    %233 = vmatprep.subr.mxu0 0.0
    %234 = vmatpush1.msra.mxu0 0.0
    %235 = vmatprep.subr.mxu0 0.0
    %236 = vmatpush1.msra.mxu0 0.0
    %237 = vmatprep.subr.mxu0 0.0
    %238 = vmatpush1.msra.mxu0 0.0
    %239 = vmatprep.subr.mxu0 0.0
    %240 = vmatpush1.msra.mxu0 0.0
    %241 = vmatprep.subr.mxu0 0.0
    %242 = vmatpush1.msra.mxu0 0.0
    %243 = vmatprep.subr.mxu0 0.0
    %244 = vmatpush1.msra.mxu0 0.0
    %245 = vmatprep.subr.mxu0 0.0
    %246 = vmatpush1.msra.mxu0 0.0
    %247 = vmatprep.subr.mxu0 0.0
    %248 = vmatpush1.msra.mxu0 0.0
    %249 = vmatprep.subr.mxu0 0.0
    %250 = vmatpush1.msra.mxu0 0.0
    %251 = vmatprep.subr.mxu0 0.0
    %252 = vmatpush1.msra.mxu0 0.0
    %253 = vmatprep.subr.mxu0 0.0
    %254 = vmatpush1.msra.mxu0 0.0
    %255 = vmatprep.mubr.f32.mxu0 0.0
    %256 = vmatmul.mubr.f32.gmra.mrb[0].mxu0 %v109
    %v257 = vpop.f32.mrb[0].mxu0
    %v258 = vadd.f32 %v103, %v257
    %v259 = vpop.f32.mrb[0].mxu0
    %260 = vmatprep.mubr.f32.mxu0 0.0
    %261 = vmatmul.mubr.f32.gmra.mrb[0].mxu0 %v112
    %v262 = vpop.f32.mrb[0].mxu0
    %v263 = vadd.f32 %v103, %v262
    %v264 = vpop.f32.mrb[0].mxu0
    %265 = vdwg.mxu0
    %v267 = vsel %vm107, %v89, 0
    %v270 = vsel %vm107, %v90, 0
    %272 = vmatprep.subr.mxu0 %v63
    %273 = vmatpush1.msra.mxu0 %v62
    %274 = vmatprep.subr.mxu0 %v66
    %275 = vmatpush1.msra.mxu0 %v65
    %276 = vmatprep.subr.mxu0 %v69
    %277 = vmatpush1.msra.mxu0 %v68
    %278 = vmatprep.subr.mxu0 %v72
    %279 = vmatpush1.msra.mxu0 %v71
    %280 = vmatprep.subr.mxu0 %v75
    %281 = vmatpush1.msra.mxu0 %v74
    %282 = vmatprep.subr.mxu0 %v78
    %283 = vmatpush1.msra.mxu0 %v77
    %284 = vmatprep.subr.mxu0 %v81
    %285 = vmatpush1.msra.mxu0 %v80
    %286 = vmatprep.subr.mxu0 %v84
    %287 = vmatpush1.msra.mxu0 %v83
    %288 = vmatprep.subr.mxu0 0.0
    %289 = vmatpush1.msra.mxu0 0.0
    %290 = vmatprep.subr.mxu0 0.0
    %291 = vmatpush1.msra.mxu0 0.0
    %292 = vmatprep.subr.mxu0 0.0
    %293 = vmatpush1.msra.mxu0 0.0
    %294 = vmatprep.subr.mxu0 0.0
    %295 = vmatpush1.msra.mxu0 0.0
    %296 = vmatprep.subr.mxu0 0.0
    %297 = vmatpush1.msra.mxu0 0.0
    %298 = vmatprep.subr.mxu0 0.0
    %299 = vmatpush1.msra.mxu0 0.0
    %300 = vmatprep.subr.mxu0 0.0
    %301 = vmatpush1.msra.mxu0 0.0
    %302 = vmatprep.subr.mxu0 0.0
    %303 = vmatpush1.msra.mxu0 0.0
    %304 = vmatprep.subr.mxu0 0.0
    %305 = vmatpush1.msra.mxu0 0.0
    %306 = vmatprep.subr.mxu0 0.0
    %307 = vmatpush1.msra.mxu0 0.0
    %308 = vmatprep.subr.mxu0 0.0
    %309 = vmatpush1.msra.mxu0 0.0
    %310 = vmatprep.subr.mxu0 0.0
    %311 = vmatpush1.msra.mxu0 0.0
    %312 = vmatprep.subr.mxu0 0.0
    %313 = vmatpush1.msra.mxu0 0.0
    %314 = vmatprep.subr.mxu0 0.0
    %315 = vmatpush1.msra.mxu0 0.0
    %316 = vmatprep.subr.mxu0 0.0
    %317 = vmatpush1.msra.mxu0 0.0
    %318 = vmatprep.subr.mxu0 0.0
    %319 = vmatpush1.msra.mxu0 0.0
    %320 = vmatprep.subr.mxu0 0.0
    %321 = vmatpush1.msra.mxu0 0.0
    %322 = vmatprep.subr.mxu0 0.0
    %323 = vmatpush1.msra.mxu0 0.0
    %324 = vmatprep.subr.mxu0 0.0
    %325 = vmatpush1.msra.mxu0 0.0
    %326 = vmatprep.subr.mxu0 0.0
    %327 = vmatpush1.msra.mxu0 0.0
    %328 = vmatprep.subr.mxu0 0.0
    %329 = vmatpush1.msra.mxu0 0.0
    %330 = vmatprep.subr.mxu0 0.0
    %331 = vmatpush1.msra.mxu0 0.0
    %332 = vmatprep.subr.mxu0 0.0
    %333 = vmatpush1.msra.mxu0 0.0
    %334 = vmatprep.subr.mxu0 0.0
    %335 = vmatpush1.msra.mxu0 0.0
    %336 = vmatprep.mubr.f32.mxu0 0.0
    %337 = vmatmul.mubr.f32.gmra.mrb[0].mxu0 %v267
    %v338 = vpop.f32.mrb[0].mxu0
    %v339 = vadd.f32 %v95, %v338
    %v340 = vpop.f32.mrb[0].mxu0
    %v341 = vadd.f32 %v99, %v340
    %342 = vmatprep.mubr.f32.mxu0 0.0
    %343 = vmatmul.mubr.f32.gmra.mrb[0].mxu0 %v270
    %v344 = vpop.f32.mrb[0].mxu0
    %v345 = vadd.f32 %v95, %v344
    %v346 = vpop.f32.mrb[0].mxu0
    %v347 = vadd.f32 %v99, %v346
    %348 = vdwg.mxu0
    %349 = vmatprep.subr.mxu0 0.0
    %350 = vmatpush1.msra.mxu0 %v64
    %351 = vmatprep.subr.mxu0 0.0
    %352 = vmatpush1.msra.mxu0 %v67
    %353 = vmatprep.subr.mxu0 0.0
    %354 = vmatpush1.msra.mxu0 %v70
    %355 = vmatprep.subr.mxu0 0.0
    %356 = vmatpush1.msra.mxu0 %v73
    %357 = vmatprep.subr.mxu0 0.0
    %358 = vmatpush1.msra.mxu0 %v76
    %359 = vmatprep.subr.mxu0 0.0
    %360 = vmatpush1.msra.mxu0 %v79
    %361 = vmatprep.subr.mxu0 0.0
    %362 = vmatpush1.msra.mxu0 %v82
    %363 = vmatprep.subr.mxu0 0.0
    %364 = vmatpush1.msra.mxu0 %v85
    %365 = vmatprep.subr.mxu0 0.0
    %366 = vmatpush1.msra.mxu0 0.0
    %367 = vmatprep.subr.mxu0 0.0
    %368 = vmatpush1.msra.mxu0 0.0
    %369 = vmatprep.subr.mxu0 0.0
    %370 = vmatpush1.msra.mxu0 0.0
    %371 = vmatprep.subr.mxu0 0.0
    %372 = vmatpush1.msra.mxu0 0.0
    %373 = vmatprep.subr.mxu0 0.0
    %374 = vmatpush1.msra.mxu0 0.0
    %375 = vmatprep.subr.mxu0 0.0
    %376 = vmatpush1.msra.mxu0 0.0
    %377 = vmatprep.subr.mxu0 0.0
    %378 = vmatpush1.msra.mxu0 0.0
    %379 = vmatprep.subr.mxu0 0.0
    %380 = vmatpush1.msra.mxu0 0.0
    %381 = vmatprep.subr.mxu0 0.0
    %382 = vmatpush1.msra.mxu0 0.0
    %383 = vmatprep.subr.mxu0 0.0
    %384 = vmatpush1.msra.mxu0 0.0
    %385 = vmatprep.subr.mxu0 0.0
    %386 = vmatpush1.msra.mxu0 0.0
    %387 = vmatprep.subr.mxu0 0.0
    %388 = vmatpush1.msra.mxu0 0.0
    %389 = vmatprep.subr.mxu0 0.0
    %390 = vmatpush1.msra.mxu0 0.0
    %391 = vmatprep.subr.mxu0 0.0
    %392 = vmatpush1.msra.mxu0 0.0
    %393 = vmatprep.subr.mxu0 0.0
    %394 = vmatpush1.msra.mxu0 0.0
    %395 = vmatprep.subr.mxu0 0.0
    %396 = vmatpush1.msra.mxu0 0.0
    %397 = vmatprep.subr.mxu0 0.0
    %398 = vmatpush1.msra.mxu0 0.0
    %399 = vmatprep.subr.mxu0 0.0
    %400 = vmatpush1.msra.mxu0 0.0
    %401 = vmatprep.subr.mxu0 0.0
    %402 = vmatpush1.msra.mxu0 0.0
    %403 = vmatprep.subr.mxu0 0.0
    %404 = vmatpush1.msra.mxu0 0.0
    %405 = vmatprep.subr.mxu0 0.0
    %406 = vmatpush1.msra.mxu0 0.0
    %407 = vmatprep.subr.mxu0 0.0
    %408 = vmatpush1.msra.mxu0 0.0
    %409 = vmatprep.subr.mxu0 0.0
    %410 = vmatpush1.msra.mxu0 0.0
    %411 = vmatprep.subr.mxu0 0.0
    %412 = vmatpush1.msra.mxu0 0.0
    %413 = vmatprep.mubr.f32.mxu0 0.0
    %414 = vmatmul.mubr.f32.gmra.mrb[0].mxu0 %v267
    %v415 = vpop.f32.mrb[0].mxu0
    %v416 = vadd.f32 %v103, %v415
    %v417 = vpop.f32.mrb[0].mxu0
    %418 = vmatprep.mubr.f32.mxu0 0.0
    %419 = vmatmul.mubr.f32.gmra.mrb[0].mxu0 %v270
    %v420 = vpop.f32.mrb[0].mxu0
    %v421 = vadd.f32 %v103, %v420
    %v422 = vpop.f32.mrb[0].mxu0
    %423 = vdwg.mxu0
    %424 = vmatprep.subr.mxu0 0.0
    %425 = vmatpush1.xpose.msra.mxu0 %v183
    %426 = vmatprep.subr.mxu0 0.0
    %427 = vmatpush1.xpose.msra.mxu0 %v341
    %428 = vmatprep.subr.mxu0 0.0
    %429 = vmatpush1.xpose.msra.mxu0 0.0
    %430 = vmatprep.subr.mxu0 0.0
    %431 = vmatpush1.xpose.msra.mxu0 0.0
    %432 = vmatprep.subr.mxu0 0.0
    %433 = vmatpush1.xpose.msra.mxu0 0.0
    %434 = vmatprep.subr.mxu0 0.0
    %435 = vmatpush1.xpose.msra.mxu0 0.0
    %436 = vmatprep.subr.mxu0 0.0
    %437 = vmatpush1.xpose.msra.mxu0 0.0
    %438 = vmatprep.subr.mxu0 0.0
    %439 = vmatpush1.xpose.msra.mxu0 0.0
    %440 = vmatprep.subr.mxu0 0.0
    %441 = vmatpush1.xpose.msra.mxu0 0.0
    %442 = vmatprep.subr.mxu0 0.0
    %443 = vmatpush1.xpose.msra.mxu0 0.0
    %444 = vmatprep.subr.mxu0 0.0
    %445 = vmatpush1.xpose.msra.mxu0 0.0
    %446 = vmatprep.subr.mxu0 0.0
    %447 = vmatpush1.xpose.msra.mxu0 0.0
    %448 = vmatprep.subr.mxu0 0.0
    %449 = vmatpush1.xpose.msra.mxu0 0.0
    %450 = vmatprep.subr.mxu0 0.0
    %451 = vmatpush1.xpose.msra.mxu0 0.0
    %452 = vmatprep.subr.mxu0 0.0
    %453 = vmatpush1.xpose.msra.mxu0 0.0
    %454 = vmatprep.subr.mxu0 0.0
    %455 = vmatpush1.xpose.msra.mxu0 0.0
    %456 = vmatprep.subr.mxu0 0.0
    %457 = vmatpush1.xpose.msra.mxu0 0.0
    %458 = vmatprep.subr.mxu0 0.0
    %459 = vmatpush1.xpose.msra.mxu0 0.0
    %460 = vmatprep.subr.mxu0 0.0
    %461 = vmatpush1.xpose.msra.mxu0 0.0
    %462 = vmatprep.subr.mxu0 0.0
    %463 = vmatpush1.xpose.msra.mxu0 0.0
    %464 = vmatprep.subr.mxu0 0.0
    %465 = vmatpush1.xpose.msra.mxu0 0.0
    %466 = vmatprep.subr.mxu0 0.0
    %467 = vmatpush1.xpose.msra.mxu0 0.0
    %468 = vmatprep.subr.mxu0 0.0
    %469 = vmatpush1.xpose.msra.mxu0 0.0
    %470 = vmatprep.subr.mxu0 0.0
    %471 = vmatpush1.xpose.msra.mxu0 0.0
    %472 = vmatprep.subr.mxu0 0.0
    %473 = vmatpush1.xpose.msra.mxu0 0.0
    %474 = vmatprep.subr.mxu0 0.0
    %475 = vmatpush1.xpose.msra.mxu0 0.0
    %476 = vmatprep.subr.mxu0 0.0
    %477 = vmatpush1.xpose.msra.mxu0 0.0
    %478 = vmatprep.subr.mxu0 0.0
    %479 = vmatpush1.xpose.msra.mxu0 0.0
    %480 = vmatprep.subr.mxu0 0.0
    %481 = vmatpush1.xpose.msra.mxu0 0.0
    %482 = vmatprep.subr.mxu0 0.0
    %483 = vmatpush1.xpose.msra.mxu0 0.0
    %484 = vmatprep.subr.mxu0 0.0
    %485 = vmatpush1.xpose.msra.mxu0 0.0
    %486 = vmatprep.subr.mxu0 0.0
    %487 = vmatpush1.xpose.msra.mxu0 0.0
    %488 = vmatprep.mubr.f32.mxu0 0.0
    %489 = vmatmul.mubr.f32.gmra.mrb[0].mxu0 %v181
    %v490 = vpop.f32.mrb[0].mxu0
    %v491 = vadd.f32 0.0, %v490
    %v492 = vpop.f32.mrb[0].mxu0
    %493 = vmatprep.mubr.f32.mxu0 0.0
    %494 = vmatmul.mubr.f32.gmra.mrb[0].mxu0 %v339
    %v495 = vpop.f32.mrb[0].mxu0
    %v496 = vadd.f32 0.0, %v495
    %v497 = vpop.f32.mrb[0].mxu0
    %498 = vdwg.mxu0
    %499 = vmatprep.subr.mxu0 0.0
    %500 = vmatpush1.xpose.msra.mxu0 %v189
    %501 = vmatprep.subr.mxu0 0.0
    %502 = vmatpush1.xpose.msra.mxu0 %v347
    %503 = vmatprep.subr.mxu0 0.0
    %504 = vmatpush1.xpose.msra.mxu0 0.0
    %505 = vmatprep.subr.mxu0 0.0
    %506 = vmatpush1.xpose.msra.mxu0 0.0
    %507 = vmatprep.subr.mxu0 0.0
    %508 = vmatpush1.xpose.msra.mxu0 0.0
    %509 = vmatprep.subr.mxu0 0.0
    %510 = vmatpush1.xpose.msra.mxu0 0.0
    %511 = vmatprep.subr.mxu0 0.0
    %512 = vmatpush1.xpose.msra.mxu0 0.0
    %513 = vmatprep.subr.mxu0 0.0
    %514 = vmatpush1.xpose.msra.mxu0 0.0
    %515 = vmatprep.subr.mxu0 0.0
    %516 = vmatpush1.xpose.msra.mxu0 0.0
    %517 = vmatprep.subr.mxu0 0.0
    %518 = vmatpush1.xpose.msra.mxu0 0.0
    %519 = vmatprep.subr.mxu0 0.0
    %520 = vmatpush1.xpose.msra.mxu0 0.0
    %521 = vmatprep.subr.mxu0 0.0
    %522 = vmatpush1.xpose.msra.mxu0 0.0
    %523 = vmatprep.subr.mxu0 0.0
    %524 = vmatpush1.xpose.msra.mxu0 0.0
    %525 = vmatprep.subr.mxu0 0.0
    %526 = vmatpush1.xpose.msra.mxu0 0.0
    %527 = vmatprep.subr.mxu0 0.0
    %528 = vmatpush1.xpose.msra.mxu0 0.0
    %529 = vmatprep.subr.mxu0 0.0
    %530 = vmatpush1.xpose.msra.mxu0 0.0
    %531 = vmatprep.subr.mxu0 0.0
    %532 = vmatpush1.xpose.msra.mxu0 0.0
    %533 = vmatprep.subr.mxu0 0.0
    %534 = vmatpush1.xpose.msra.mxu0 0.0
    %535 = vmatprep.subr.mxu0 0.0
    %536 = vmatpush1.xpose.msra.mxu0 0.0
    %537 = vmatprep.subr.mxu0 0.0
    %538 = vmatpush1.xpose.msra.mxu0 0.0
    %539 = vmatprep.subr.mxu0 0.0
    %540 = vmatpush1.xpose.msra.mxu0 0.0
    %541 = vmatprep.subr.mxu0 0.0
    %542 = vmatpush1.xpose.msra.mxu0 0.0
    %543 = vmatprep.subr.mxu0 0.0
    %544 = vmatpush1.xpose.msra.mxu0 0.0
    %545 = vmatprep.subr.mxu0 0.0
    %546 = vmatpush1.xpose.msra.mxu0 0.0
    %547 = vmatprep.subr.mxu0 0.0
    %548 = vmatpush1.xpose.msra.mxu0 0.0
    %549 = vmatprep.subr.mxu0 0.0
    %550 = vmatpush1.xpose.msra.mxu0 0.0
    %551 = vmatprep.subr.mxu0 0.0
    %552 = vmatpush1.xpose.msra.mxu0 0.0
    %553 = vmatprep.subr.mxu0 0.0
    %554 = vmatpush1.xpose.msra.mxu0 0.0
    %555 = vmatprep.subr.mxu0 0.0
    %556 = vmatpush1.xpose.msra.mxu0 0.0
    %557 = vmatprep.subr.mxu0 0.0
    %558 = vmatpush1.xpose.msra.mxu0 0.0
    %559 = vmatprep.subr.mxu0 0.0
    %560 = vmatpush1.xpose.msra.mxu0 0.0
    %561 = vmatprep.subr.mxu0 0.0
    %562 = vmatpush1.xpose.msra.mxu0 0.0
    %563 = vmatprep.mubr.f32.mxu0 0.0
    %564 = vmatmul.mubr.f32.gmra.mrb[0].mxu0 %v187
    %v565 = vpop.f32.mrb[0].mxu0
    %v566 = vadd.f32 0.0, %v565
    %v567 = vpop.f32.mrb[0].mxu0
    %568 = vmatprep.mubr.f32.mxu0 0.0
    %569 = vmatmul.mubr.f32.gmra.mrb[0].mxu0 %v345
    %v570 = vpop.f32.mrb[0].mxu0
    %v571 = vadd.f32 0.0, %v570
    %v572 = vpop.f32.mrb[0].mxu0
    %573 = vdwg.mxu0
    %vm574 = vcmask 130048
    %v575 = vsel %vm574, %v491, -inf
    %576 = vmax.xlane.f32.xlu0 %v575
    %v577 = vpop.xlane.xlu0 %576
    %v578 = vsel %vm574, %v496, -inf
    %579 = vmax.xlane.f32.xlu0 %v578
    %v580 = vpop.xlane.xlu0 %579
    %v581 = vsel %vm574, %v566, -inf
    %582 = vmax.xlane.f32.xlu0 %v581
    %v583 = vpop.xlane.xlu0 %582
    %v584 = vsel %vm574, %v571, -inf
    %585 = vmax.xlane.f32.xlu0 %v584
    %v586 = vpop.xlane.xlu0 %585
    %v587 = vsub.f32 %v491, %v577
    %v588 = vsub.f32 %v496, %v580
    %v589 = vsub.f32 %v566, %v583
    %v590 = vsub.f32 %v571, %v586
    %v591 = vmul.f32 %v587, 1.442695
    %v592 = vpow.pop %v591
    %v593 = vmul.f32 %v588, 1.442695
    %v594 = vpow.pop %v593
    %v595 = vmul.f32 %v589, 1.442695
    %v596 = vpow.pop %v595
    %v597 = vmul.f32 %v590, 1.442695
    %v598 = vpow.pop %v597
    %v599 = vsel %vm574, %v592, 0.0
    %600 = vadd.xlane.f32.xlu0 %v599
    %v601 = vpop.xlane.xlu0 %600
    %v602 = vsel %vm574, %v594, 0.0
    %603 = vadd.xlane.f32.xlu0 %v602
    %v604 = vpop.xlane.xlu0 %603
    %v605 = vsel %vm574, %v596, 0.0
    %606 = vadd.xlane.f32.xlu0 %v605
    %v607 = vpop.xlane.xlu0 %606
    %v608 = vsel %vm574, %v598, 0.0
    %609 = vadd.xlane.f32.xlu0 %v608
    %v610 = vpop.xlane.xlu0 %609
    %v611 = vrcp.pop %v601
    %v612 = vrcp.pop %v604
    %v613 = vrcp.pop %v607
    %v614 = vrcp.pop %v610
    %v615 = vmul.f32 %v592, %v611
    %v616 = vmul.f32 %v594, %v612
    %v617 = vmul.f32 %v596, %v613
    %v618 = vmul.f32 %v598, %v614
    %v620 = vsel %vm574, %v615, 0
    %v623 = vsel %vm574, %v616, 0
    %625 = vmatprep.subr.mxu0 0.0
    %626 = vmatpush1.msra.mxu0 %v258
    %627 = vmatprep.subr.mxu0 0.0
    %628 = vmatpush1.msra.mxu0 %v416
    %629 = vmatprep.subr.mxu0 0.0
    %630 = vmatpush1.msra.mxu0 0.0
    %631 = vmatprep.subr.mxu0 0.0
    %632 = vmatpush1.msra.mxu0 0.0
    %633 = vmatprep.subr.mxu0 0.0
    %634 = vmatpush1.msra.mxu0 0.0
    %635 = vmatprep.subr.mxu0 0.0
    %636 = vmatpush1.msra.mxu0 0.0
    %637 = vmatprep.subr.mxu0 0.0
    %638 = vmatpush1.msra.mxu0 0.0
    %639 = vmatprep.subr.mxu0 0.0
    %640 = vmatpush1.msra.mxu0 0.0
    %641 = vmatprep.subr.mxu0 0.0
    %642 = vmatpush1.msra.mxu0 0.0
    %643 = vmatprep.subr.mxu0 0.0
    %644 = vmatpush1.msra.mxu0 0.0
    %645 = vmatprep.subr.mxu0 0.0
    %646 = vmatpush1.msra.mxu0 0.0
    %647 = vmatprep.subr.mxu0 0.0
    %648 = vmatpush1.msra.mxu0 0.0
    %649 = vmatprep.subr.mxu0 0.0
    %650 = vmatpush1.msra.mxu0 0.0
    %651 = vmatprep.subr.mxu0 0.0
    %652 = vmatpush1.msra.mxu0 0.0
    %653 = vmatprep.subr.mxu0 0.0
    %654 = vmatpush1.msra.mxu0 0.0
    %655 = vmatprep.subr.mxu0 0.0
    %656 = vmatpush1.msra.mxu0 0.0
    %657 = vmatprep.subr.mxu0 0.0
    %658 = vmatpush1.msra.mxu0 0.0
    %659 = vmatprep.subr.mxu0 0.0
    %660 = vmatpush1.msra.mxu0 0.0
    %661 = vmatprep.subr.mxu0 0.0
    %662 = vmatpush1.msra.mxu0 0.0
    %663 = vmatprep.subr.mxu0 0.0
    %664 = vmatpush1.msra.mxu0 0.0
    %665 = vmatprep.subr.mxu0 0.0
    %666 = vmatpush1.msra.mxu0 0.0
    %667 = vmatprep.subr.mxu0 0.0
    %668 = vmatpush1.msra.mxu0 0.0
    %669 = vmatprep.subr.mxu0 0.0
    %670 = vmatpush1.msra.mxu0 0.0
    %671 = vmatprep.subr.mxu0 0.0
    %672 = vmatpush1.msra.mxu0 0.0
    %673 = vmatprep.subr.mxu0 0.0
    %674 = vmatpush1.msra.mxu0 0.0
    %675 = vmatprep.subr.mxu0 0.0
    %676 = vmatpush1.msra.mxu0 0.0
    %677 = vmatprep.subr.mxu0 0.0
    %678 = vmatpush1.msra.mxu0 0.0
    %679 = vmatprep.subr.mxu0 0.0
    %680 = vmatpush1.msra.mxu0 0.0
    %681 = vmatprep.subr.mxu0 0.0
    %682 = vmatpush1.msra.mxu0 0.0
    %683 = vmatprep.subr.mxu0 0.0
    %684 = vmatpush1.msra.mxu0 0.0
    %685 = vmatprep.subr.mxu0 0.0
    %686 = vmatpush1.msra.mxu0 0.0
    %687 = vmatprep.subr.mxu0 0.0
    %688 = vmatpush1.msra.mxu0 0.0
    %689 = vmatprep.mubr.f32.mxu0 0.0
    %690 = vmatmul.mubr.f32.gmra.mrb[0].mxu0 %v620
    %v691 = vpop.f32.mrb[0].mxu0
    %v692 = vadd.f32 0.0, %v691
    %v693 = vpop.f32.mrb[0].mxu0
    %694 = vmatprep.mubr.f32.mxu0 0.0
    %695 = vmatmul.mubr.f32.gmra.mrb[0].mxu0 %v623
    %v696 = vpop.f32.mrb[0].mxu0
    %v697 = vadd.f32 0.0, %v696
    %v698 = vpop.f32.mrb[0].mxu0
    %699 = vdwg.mxu0
    %v701 = vsel %vm574, %v617, 0
    %v704 = vsel %vm574, %v618, 0
    %706 = vmatprep.subr.mxu0 0.0
    %707 = vmatpush1.msra.mxu0 %v263
    %708 = vmatprep.subr.mxu0 0.0
    %709 = vmatpush1.msra.mxu0 %v421
    %710 = vmatprep.subr.mxu0 0.0
    %711 = vmatpush1.msra.mxu0 0.0
    %712 = vmatprep.subr.mxu0 0.0
    %713 = vmatpush1.msra.mxu0 0.0
    %714 = vmatprep.subr.mxu0 0.0
    %715 = vmatpush1.msra.mxu0 0.0
    %716 = vmatprep.subr.mxu0 0.0
    %717 = vmatpush1.msra.mxu0 0.0
    %718 = vmatprep.subr.mxu0 0.0
    %719 = vmatpush1.msra.mxu0 0.0
    %720 = vmatprep.subr.mxu0 0.0
    %721 = vmatpush1.msra.mxu0 0.0
    %722 = vmatprep.subr.mxu0 0.0
    %723 = vmatpush1.msra.mxu0 0.0
    %724 = vmatprep.subr.mxu0 0.0
    %725 = vmatpush1.msra.mxu0 0.0
    %726 = vmatprep.subr.mxu0 0.0
    %727 = vmatpush1.msra.mxu0 0.0
    %728 = vmatprep.subr.mxu0 0.0
    %729 = vmatpush1.msra.mxu0 0.0
    %730 = vmatprep.subr.mxu0 0.0
    %731 = vmatpush1.msra.mxu0 0.0
    %732 = vmatprep.subr.mxu0 0.0
    %733 = vmatpush1.msra.mxu0 0.0
    %734 = vmatprep.subr.mxu0 0.0
    %735 = vmatpush1.msra.mxu0 0.0
    %736 = vmatprep.subr.mxu0 0.0
    %737 = vmatpush1.msra.mxu0 0.0
    %738 = vmatprep.subr.mxu0 0.0
    %739 = vmatpush1.msra.mxu0 0.0
    %740 = vmatprep.subr.mxu0 0.0
    %741 = vmatpush1.msra.mxu0 0.0
    %742 = vmatprep.subr.mxu0 0.0
    %743 = vmatpush1.msra.mxu0 0.0
    %744 = vmatprep.subr.mxu0 0.0
    %745 = vmatpush1.msra.mxu0 0.0
    %746 = vmatprep.subr.mxu0 0.0
    %747 = vmatpush1.msra.mxu0 0.0
    %748 = vmatprep.subr.mxu0 0.0
    %749 = vmatpush1.msra.mxu0 0.0
    %750 = vmatprep.subr.mxu0 0.0
    %751 = vmatpush1.msra.mxu0 0.0
    %752 = vmatprep.subr.mxu0 0.0
    %753 = vmatpush1.msra.mxu0 0.0
    %754 = vmatprep.subr.mxu0 0.0
    %755 = vmatpush1.msra.mxu0 0.0
    %756 = vmatprep.subr.mxu0 0.0
    %757 = vmatpush1.msra.mxu0 0.0
    %758 = vmatprep.subr.mxu0 0.0
    %759 = vmatpush1.msra.mxu0 0.0
    %760 = vmatprep.subr.mxu0 0.0
    %761 = vmatpush1.msra.mxu0 0.0
    %762 = vmatprep.subr.mxu0 0.0
    %763 = vmatpush1.msra.mxu0 0.0
    %764 = vmatprep.subr.mxu0 0.0
    %765 = vmatpush1.msra.mxu0 0.0
    %766 = vmatprep.subr.mxu0 0.0
    %767 = vmatpush1.msra.mxu0 0.0
    %768 = vmatprep.subr.mxu0 0.0
    %769 = vmatpush1.msra.mxu0 0.0
    %770 = vmatprep.mubr.f32.mxu0 0.0
    %771 = vmatmul.mubr.f32.gmra.mrb[0].mxu0 %v701
    %v772 = vpop.f32.mrb[0].mxu0
    %v773 = vadd.f32 0.0, %v772
    %v774 = vpop.f32.mrb[0].mxu0
    %775 = vmatprep.mubr.f32.mxu0 0.0
    %776 = vmatmul.mubr.f32.gmra.mrb[0].mxu0 %v704
    %v777 = vpop.f32.mrb[0].mxu0
    %v778 = vadd.f32 0.0, %v777
    %v779 = vpop.f32.mrb[0].mxu0
    %780 = vdwg.mxu0
    %781 = vst [vmem:[#allocation8] sm:$0xff] %v692
    %782 = vst [vmem:[#allocation8 + $0x8] sm:$0xff] %v697
    %783 = vst [vmem:[#allocation8 + $0x10] sm:$0xff] %v773
    %784 = vst [vmem:[#allocation8 + $0x18] sm:$0xff] %v778
    %v785 = vsel %vm574, %v615, 0.0
    %v786 = vsel %vm574, %v616, 0.0
    %v787 = vsel %vm574, %v617, 0.0
    %v788 = vsel %vm574, %v618, 0.0
    %789 = vst [vmem:[#allocation9] sm:$0xff] %v785
    %790 = vst [vmem:[#allocation9 + $0x8] sm:$0xff] %v786
    %791 = vst [vmem:[#allocation9 + $0x10] sm:$0xff] %v787
    %792 = vst [vmem:[#allocation9 + $0x18] sm:$0xff] %v788
    // Predicated region
    $region30: #{tpu_custom_call.1} parent=1 // pred_check
      _
    $region31: #{tpu_custom_call.1} parent=1 // pred_check_branch
      %794 = sbr.rel (0) target = $region33
    $region32: #{tpu_custom_call.1} parent=1 // pred_region
      %s796 = ssub.s32 512, 512
      %797 = vsyncadd [#allocation4], %s796
      %s798 = sshll.u32 [#allocation8], 4
      %s799 = int_to_ptr.vmem [resolvable:$true] %s798
      %804 = dma.vmem_to_hbm [thread:$0]  %s799, 512, %s4, [#allocation4], 128, 128, 8
    $region33: #{tpu_custom_call.1} parent=1 // pred_fallthru
      _
    // Predicated region
    $region34: #{tpu_custom_call.1} parent=1 // pred_check
      _
    $region35: #{tpu_custom_call.1} parent=1 // pred_check_branch
      %806 = sbr.rel (0) target = $region37
    $region36: #{tpu_custom_call.1} parent=1 // pred_region
      %s808 = ssub.s32 512, 512
      %809 = vsyncadd [#allocation10], %s808
      %s810 = sshll.u32 [#allocation9], 4
      %s811 = int_to_ptr.vmem [resolvable:$true] %s810
      %816 = dma.vmem_to_hbm [thread:$0]  %s811, 512, %s5, [#allocation10], 128, 128, 8
    $region37: #{tpu_custom_call.1} parent=1 // pred_fallthru
      _
    // Predicated region
    $region38: #{tpu_custom_call.1} parent=1 // pred_check
      _
    $region39: #{tpu_custom_call.1} parent=1 // pred_check_branch
      %818 = sbr.rel (0) target = $region41
    $region40: #{tpu_custom_call.1} parent=1 // pred_region
      %819 = dma.done [#allocation4], 512
    $region41: #{tpu_custom_call.1} parent=1 // pred_fallthru
      _
    // Predicated region
    $region42: #{tpu_custom_call.1} parent=1 // pred_check
      _
    $region43: #{tpu_custom_call.1} parent=1 // pred_check_branch
      %821 = sbr.rel (0) target = $region45
    $region44: #{tpu_custom_call.1} parent=1 // pred_region
      %822 = dma.done [#allocation10], 512
    $region45: #{tpu_custom_call.1} parent=1 // pred_fallthru
      _
    %823 = vsyncpa [#allocation3], 1
    %824 = vsyncpa [#allocation6], 1
    %825 = vsyncpa [#allocation4], 1
    %826 = vsyncpa [#allocation10], 1

</llo_original>
